<compile_context>
chip_gen: v5e
topology: v5e:2x2
jax: 0.10.0
libtpu: 0.0.40
codegen_flags: <defaults>
</compile_context>

<pallas_src>
import jax
import jax.numpy as jnp
from jax.experimental import pallas as pl
from jax.experimental.pallas import tpu as pltpu


def _relu_kernel(x_ref, o_ref):
    # Pure VPU elementwise max against a dtype-matched zero.
    zero = jnp.zeros((), x_ref.dtype)
    o_ref[...] = jnp.maximum(x_ref[...], zero)


def _choose_lanes(n: int, max_lanes: int = 8192) -> int:
    """Largest multiple of 128 that divides n and is <= max_lanes."""
    q = n // 128
    best = 1
    d = 1
    while d * d <= q:
        if q % d == 0:
            for c in (d, q // d):
                if c > best and 128 * c <= max_lanes:
                    best = c
        d += 1
    return 128 * best


def _choose_tile_rows(rows: int, lanes: int, itemsize: int,
                      target_bytes: int = 4 * 1024 * 1024) -> int:
    """Row-tile size for the large-input path: multiple of 8, ~target_bytes
    per input tile (double-buffered in+out footprint ~4x that, which stays
    under the scoped-VMEM default on v5e/v6e/v7x). Full extent if it fits."""
    tile = max(8, (target_bytes // (lanes * itemsize)) // 8 * 8)
    if tile >= rows:
        return rows  # single full-extent block (always a legal block shape)
    return tile


# In-slab byte threshold below which we use one full-extent block (no grid).
# Worst-case VMEM footprint is ~4x this (double-buffered in + out) = 8 MiB,
# comfortably under the 16/32/32 MiB scoped defaults on v5e/v6e/v7x.
_SINGLE_BLOCK_MAX_BYTES = 2 * 1024 * 1024


def relu_pallas(x: jax.Array) -> jax.Array:
    orig_shape = x.shape
    dtype = x.dtype
    n = x.size
    if n == 0:
        return x

    if n % 128 == 0:
        # No-padding path (always taken for this module's shapes).
        lanes = _choose_lanes(n)
        pad = 0
        x2d = x.reshape(n // lanes, lanes)   # contiguous reshape: free bitcast
    else:
        # Fallback for arbitrary sizes: pad flat view up to a (rows, 128)
        # slab. ReLU(0) == 0 so the padding is benign; never hit here.
        lanes = 128
        rows_p = -(-n // lanes)
        pad = rows_p * lanes - n
        x2d = jnp.pad(x.reshape(-1), (0, pad)).reshape(rows_p, lanes)

    rows = x2d.shape[0]
    itemsize = jnp.dtype(dtype).itemsize
    slab_bytes = rows * lanes * itemsize

    if slab_bytes <= _SINGLE_BLOCK_MAX_BYTES:
        # Small tensor: single full-extent block. No grid loop, no per-step
        # pipeline overhead, no ragged masked tile. Legal block shape because
        # it equals the full array dims.
        out2d = pl.pallas_call(
            _relu_kernel,
            out_shape=jax.ShapeDtypeStruct((rows, lanes), dtype),
            in_specs=[pl.BlockSpec((rows, lanes), lambda: (0, 0))],
            out_specs=pl.BlockSpec((rows, lanes), lambda: (0, 0)),
        )(x2d)
    else:
        # Large tensor: 1-D parallel row-tiled grid, ~4 MiB input tiles.
        tile_rows = _choose_tile_rows(rows, lanes, itemsize)
        grid = (pl.cdiv(rows, tile_rows),)
        out2d = pl.pallas_call(
            _relu_kernel,
            out_shape=jax.ShapeDtypeStruct((rows, lanes), dtype),
            grid=grid,
            in_specs=[pl.BlockSpec((tile_rows, lanes), lambda i: (i, 0))],
            out_specs=pl.BlockSpec((tile_rows, lanes), lambda i: (i, 0)),
            compiler_params=pltpu.CompilerParams(
                dimension_semantics=("parallel",),
            ),
        )(x2d)

    if pad:
        return out2d.reshape(-1)[:n].reshape(orig_shape)
    return out2d.reshape(orig_shape)


if __name__ == "__main__":
    key = jax.random.PRNGKey(0)
    # Same shape as the reference module's input: [1, 1792, 7, 7] (NCHW)
    x = jax.random.normal(key, (1, 1792, 7, 7), dtype=jnp.float32)

    y = jax.block_until_ready(relu_pallas(x))

    # Correctness check against plain JAX reference.
    y_ref = jnp.maximum(x, 0.0)
    assert y.shape == x.shape and y.dtype == x.dtype
    assert bool(jnp.allclose(y, y_ref)), "mismatch vs reference ReLU"

    print("KERNEL_OK")
</pallas_src>

<mosaic_0001>
module attributes {stable_mosaic.version = 11 : i64} {
  func.func @_relu_kernel(%arg0: memref<14x6272xf32, #tpu.memory_space<vmem>>, %arg1: memref<14x6272xf32, #tpu.memory_space<vmem>>) attributes {dimension_semantics = [], scalar_prefetch = 0 : i64, scratch_operands = 0 : i64, tpu.core_type = #tpu.core_type<tc>} {
    %c0 = arith.constant 0 : index
    %c0_0 = arith.constant 0 : index
    %0 = vector.load %arg0[%c0, %c0_0] : memref<14x6272xf32, #tpu.memory_space<vmem>>, vector<14x6272xf32>
    %cst = arith.constant 0.000000e+00 : f32
    %1 = vector.broadcast %cst : f32 to vector<14x6272xf32>
    %2 = arith.maximumf %0, %1 : vector<14x6272xf32>
    %c0_1 = arith.constant 0 : index
    %c0_2 = arith.constant 0 : index
    %3 = vector.load %arg1[%c0_1, %c0_2] : memref<14x6272xf32, #tpu.memory_space<vmem>>, vector<14x6272xf32>
    tpu.vector_store %arg1[%c0_1, %c0_2], %2 {strides = array<i32>} : memref<14x6272xf32, #tpu.memory_space<vmem>>, vector<14x6272xf32>,
    return
  }
}

</mosaic_0001>

<llo_original>
// kernel: tpu_custom_call.1
$region0: #{tpu_custom_call.1}
  #allocation0 [shape = 'u32[]', space=smem, size = 0x4, offset = 0x4, fixed_abs, tag = 'smem constant byte address 0x4 - core index']
  #allocation1 [shape = 'u32[72,128]{1,0:T(1,128)}', space=vmem, size = 0x9000, scoped, tag = 'internal scratch']
  %s0 = inlined_call_operand.hbm [shape: f32[14,6272], index: 0, kind: input, shape index: {}]
  %s1 = inlined_call_operand.hbm [shape: f32[14,6272], index: 1, kind: output, shape index: {}]
  %s2 = sld [smem:[#allocation0]]
  $region18: #{tpu_custom_call.1} parent=0
    _
  %s4 = ssub.s32 1, %s2
  %s5 = scalar_select 0, %s4, %s2
  $region1: #{tpu_custom_call.1} parent=0
    #allocation2 [shape = 'u8[401408]{0}', space=vmem, size = 0x62000, scoped, tag = 'input window, operand 0, single buffered']
    #allocation3 [shape = 's32[1]{0}', space=sflag, size = 0x4, scoped, tag = 'scoped memory for tpu_custom_call.1']
    #allocation4 [shape = 's32[1]{0}', space=sflag, size = 0x4, scoped, tag = 'scoped memory for tpu_custom_call.1']
    #allocation5 [shape = 'u8[401408]{0}', space=vmem, size = 0x62000, scoped, tag = 'output window, operand 0, single buffered']
    %6 = vsyncpa [#allocation3], 0
    %7 = vsyncpa [#allocation4], 0
    // Predicated region
    $region2: #{tpu_custom_call.1} parent=1 // pred_check
      _
    $region3: #{tpu_custom_call.1} parent=1 // pred_check_branch
      %9 = sbr.rel (0) target = $region5
    $region4: #{tpu_custom_call.1} parent=1 // pred_region
      %11 = vsyncadd [#allocation3], 0
      %s12 = sshll.u32 %s0, 4
      %s13 = int_to_ptr.hbm [resolvable:$true] %s12
      %s14 = sshll.u32 [#allocation2], 4
      %s15 = int_to_ptr.vmem [resolvable:$true] %s14
      %20 = dma.hbm_to_vmem [thread:$0]  %s13, 12544, %s15, [#allocation3], 6272, 6272, 392
    $region5: #{tpu_custom_call.1} parent=1 // pred_fallthru
      _
    // Predicated region
    $region6: #{tpu_custom_call.1} parent=1 // pred_check
      _
    $region7: #{tpu_custom_call.1} parent=1 // pred_check_branch
      %22 = sbr.rel (0) target = $region9
    $region8: #{tpu_custom_call.1} parent=1 // pred_region
      %24 = dma.done [#allocation3], 12544
    $region9: #{tpu_custom_call.1} parent=1 // pred_fallthru
      _
    %v25 = vld [vmem:[#allocation2] sm:$0xff]
    %v26 = vld [vmem:[#allocation2 + $0x8] sm:$0xff]
    %v27 = vld [vmem:[#allocation2 + $0x10] sm:$0xff]
    %v28 = vld [vmem:[#allocation2 + $0x18] sm:$0xff]
    %v29 = vld [vmem:[#allocation2 + $0x20] sm:$0xff]
    %v30 = vld [vmem:[#allocation2 + $0x28] sm:$0xff]
    %v31 = vld [vmem:[#allocation2 + $0x30] sm:$0xff]
    %v32 = vld [vmem:[#allocation2 + $0x38] sm:$0xff]
    %v33 = vld [vmem:[#allocation2 + $0x40] sm:$0xff]
    %v34 = vld [vmem:[#allocation2 + $0x48] sm:$0xff]
    %v35 = vld [vmem:[#allocation2 + $0x50] sm:$0xff]
    %v36 = vld [vmem:[#allocation2 + $0x58] sm:$0xff]
    %v37 = vld [vmem:[#allocation2 + $0x60] sm:$0xff]
    %v38 = vld [vmem:[#allocation2 + $0x68] sm:$0xff]
    %v39 = vld [vmem:[#allocation2 + $0x70] sm:$0xff]
    %v40 = vld [vmem:[#allocation2 + $0x78] sm:$0xff]
    %v41 = vld [vmem:[#allocation2 + $0x80] sm:$0xff]
    %v42 = vld [vmem:[#allocation2 + $0x88] sm:$0xff]
    %v43 = vld [vmem:[#allocation2 + $0x90] sm:$0xff]
    %v44 = vld [vmem:[#allocation2 + $0x98] sm:$0xff]
    %v45 = vld [vmem:[#allocation2 + $0xa0] sm:$0xff]
    %v46 = vld [vmem:[#allocation2 + $0xa8] sm:$0xff]
    %v47 = vld [vmem:[#allocation2 + $0xb0] sm:$0xff]
    %v48 = vld [vmem:[#allocation2 + $0xb8] sm:$0xff]
    %v49 = vld [vmem:[#allocation2 + $0xc0] sm:$0xff]
    %v50 = vld [vmem:[#allocation2 + $0xc8] sm:$0xff]
    %v51 = vld [vmem:[#allocation2 + $0xd0] sm:$0xff]
    %v52 = vld [vmem:[#allocation2 + $0xd8] sm:$0xff]
    %v53 = vld [vmem:[#allocation2 + $0xe0] sm:$0xff]
    %v54 = vld [vmem:[#allocation2 + $0xe8] sm:$0xff]
    %v55 = vld [vmem:[#allocation2 + $0xf0] sm:$0xff]
    %v56 = vld [vmem:[#allocation2 + $0xf8] sm:$0xff]
    %v57 = vld [vmem:[#allocation2 + $0x100] sm:$0xff]
    %v58 = vld [vmem:[#allocation2 + $0x108] sm:$0xff]
    %v59 = vld [vmem:[#allocation2 + $0x110] sm:$0xff]
    %v60 = vld [vmem:[#allocation2 + $0x118] sm:$0xff]
    %v61 = vld [vmem:[#allocation2 + $0x120] sm:$0xff]
    %v62 = vld [vmem:[#allocation2 + $0x128] sm:$0xff]
    %v63 = vld [vmem:[#allocation2 + $0x130] sm:$0xff]
    %v64 = vld [vmem:[#allocation2 + $0x138] sm:$0xff]
    %v65 = vld [vmem:[#allocation2 + $0x140] sm:$0xff]
    %v66 = vld [vmem:[#allocation2 + $0x148] sm:$0xff]
    %v67 = vld [vmem:[#allocation2 + $0x150] sm:$0xff]
    %v68 = vld [vmem:[#allocation2 + $0x158] sm:$0xff]
    %v69 = vld [vmem:[#allocation2 + $0x160] sm:$0xff]
    %v70 = vld [vmem:[#allocation2 + $0x168] sm:$0xff]
    %v71 = vld [vmem:[#allocation2 + $0x170] sm:$0xff]
    %v72 = vld [vmem:[#allocation2 + $0x178] sm:$0xff]
    %v73 = vld [vmem:[#allocation2 + $0x180] sm:$0xff]
    %v74 = vld [vmem:[#allocation2 + $0x188] sm:$0x3f]
    %v75 = vld [vmem:[#allocation2 + $0x190] sm:$0x3f]
    %v76 = vld [vmem:[#allocation2 + $0x198] sm:$0x3f]
    %v77 = vld [vmem:[#allocation2 + $0x1a0] sm:$0x3f]
    %v78 = vld [vmem:[#allocation2 + $0x1a8] sm:$0x3f]
    %v79 = vld [vmem:[#allocation2 + $0x1b0] sm:$0x3f]
    %v80 = vld [vmem:[#allocation2 + $0x1b8] sm:$0x3f]
    %v81 = vld [vmem:[#allocation2 + $0x1c0] sm:$0x3f]
    %v82 = vld [vmem:[#allocation2 + $0x1c8] sm:$0x3f]
    %v83 = vld [vmem:[#allocation2 + $0x1d0] sm:$0x3f]
    %v84 = vld [vmem:[#allocation2 + $0x1d8] sm:$0x3f]
    %v85 = vld [vmem:[#allocation2 + $0x1e0] sm:$0x3f]
    %v86 = vld [vmem:[#allocation2 + $0x1e8] sm:$0x3f]
    %v87 = vld [vmem:[#allocation2 + $0x1f0] sm:$0x3f]
    %v88 = vld [vmem:[#allocation2 + $0x1f8] sm:$0x3f]
    %v89 = vld [vmem:[#allocation2 + $0x200] sm:$0x3f]
    %v90 = vld [vmem:[#allocation2 + $0x208] sm:$0x3f]
    %v91 = vld [vmem:[#allocation2 + $0x210] sm:$0x3f]
    %v92 = vld [vmem:[#allocation2 + $0x218] sm:$0x3f]
    %v93 = vld [vmem:[#allocation2 + $0x220] sm:$0x3f]
    %v94 = vld [vmem:[#allocation2 + $0x228] sm:$0x3f]
    %v95 = vld [vmem:[#allocation2 + $0x230] sm:$0x3f]
    %v96 = vld [vmem:[#allocation2 + $0x238] sm:$0x3f]
    %v97 = vld [vmem:[#allocation2 + $0x240] sm:$0x3f]
    %v98 = vld [vmem:[#allocation2 + $0x248] sm:$0x3f]
    %v99 = vld [vmem:[#allocation2 + $0x250] sm:$0x3f]
    %v100 = vld [vmem:[#allocation2 + $0x258] sm:$0x3f]
    %v101 = vld [vmem:[#allocation2 + $0x260] sm:$0x3f]
    %v102 = vld [vmem:[#allocation2 + $0x268] sm:$0x3f]
    %v103 = vld [vmem:[#allocation2 + $0x270] sm:$0x3f]
    %v104 = vld [vmem:[#allocation2 + $0x278] sm:$0x3f]
    %v105 = vld [vmem:[#allocation2 + $0x280] sm:$0x3f]
    %v106 = vld [vmem:[#allocation2 + $0x288] sm:$0x3f]
    %v107 = vld [vmem:[#allocation2 + $0x290] sm:$0x3f]
    %v108 = vld [vmem:[#allocation2 + $0x298] sm:$0x3f]
    %v109 = vld [vmem:[#allocation2 + $0x2a0] sm:$0x3f]
    %v110 = vld [vmem:[#allocation2 + $0x2a8] sm:$0x3f]
    %v111 = vld [vmem:[#allocation2 + $0x2b0] sm:$0x3f]
    %v112 = vld [vmem:[#allocation2 + $0x2b8] sm:$0x3f]
    %v113 = vld [vmem:[#allocation2 + $0x2c0] sm:$0x3f]
    %v114 = vld [vmem:[#allocation2 + $0x2c8] sm:$0x3f]
    %v115 = vld [vmem:[#allocation2 + $0x2d0] sm:$0x3f]
    %v116 = vld [vmem:[#allocation2 + $0x2d8] sm:$0x3f]
    %v117 = vld [vmem:[#allocation2 + $0x2e0] sm:$0x3f]
    %v118 = vld [vmem:[#allocation2 + $0x2e8] sm:$0x3f]
    %v119 = vld [vmem:[#allocation2 + $0x2f0] sm:$0x3f]
    %v120 = vld [vmem:[#allocation2 + $0x2f8] sm:$0x3f]
    %v121 = vld [vmem:[#allocation2 + $0x300] sm:$0x3f]
    %v122 = vld [vmem:[#allocation2 + $0x308] sm:$0x3f]
    %v123 = vmax.f32 %v25, 0.0
    %v124 = vmax.f32 %v26, 0.0
    %v125 = vmax.f32 %v27, 0.0
    %v126 = vmax.f32 %v28, 0.0
    %v127 = vmax.f32 %v29, 0.0
    %v128 = vmax.f32 %v30, 0.0
    %v129 = vmax.f32 %v31, 0.0
    %v130 = vmax.f32 %v32, 0.0
    %v131 = vmax.f32 %v33, 0.0
    %v132 = vmax.f32 %v34, 0.0
    %v133 = vmax.f32 %v35, 0.0
    %v134 = vmax.f32 %v36, 0.0
    %v135 = vmax.f32 %v37, 0.0
    %v136 = vmax.f32 %v38, 0.0
    %v137 = vmax.f32 %v39, 0.0
    %v138 = vmax.f32 %v40, 0.0
    %v139 = vmax.f32 %v41, 0.0
    %v140 = vmax.f32 %v42, 0.0
    %v141 = vmax.f32 %v43, 0.0
    %v142 = vmax.f32 %v44, 0.0
    %v143 = vmax.f32 %v45, 0.0
    %v144 = vmax.f32 %v46, 0.0
    %v145 = vmax.f32 %v47, 0.0
    %v146 = vmax.f32 %v48, 0.0
    %v147 = vmax.f32 %v49, 0.0
    %v148 = vmax.f32 %v50, 0.0
    %v149 = vmax.f32 %v51, 0.0
    %v150 = vmax.f32 %v52, 0.0
    %v151 = vmax.f32 %v53, 0.0
    %v152 = vmax.f32 %v54, 0.0
    %v153 = vmax.f32 %v55, 0.0
    %v154 = vmax.f32 %v56, 0.0
    %v155 = vmax.f32 %v57, 0.0
    %v156 = vmax.f32 %v58, 0.0
    %v157 = vmax.f32 %v59, 0.0
    %v158 = vmax.f32 %v60, 0.0
    %v159 = vmax.f32 %v61, 0.0
    %v160 = vmax.f32 %v62, 0.0
    %v161 = vmax.f32 %v63, 0.0
    %v162 = vmax.f32 %v64, 0.0
    %v163 = vmax.f32 %v65, 0.0
    %v164 = vmax.f32 %v66, 0.0
    %v165 = vmax.f32 %v67, 0.0
    %v166 = vmax.f32 %v68, 0.0
    %v167 = vmax.f32 %v69, 0.0
    %v168 = vmax.f32 %v70, 0.0
    %v169 = vmax.f32 %v71, 0.0
    %v170 = vmax.f32 %v72, 0.0
    %v171 = vmax.f32 %v73, 0.0
    %v172 = vmax.f32 %v74, 0.0
    %v173 = vmax.f32 %v75, 0.0
    %v174 = vmax.f32 %v76, 0.0
    %v175 = vmax.f32 %v77, 0.0
    %v176 = vmax.f32 %v78, 0.0
    %v177 = vmax.f32 %v79, 0.0
    %v178 = vmax.f32 %v80, 0.0
    %v179 = vmax.f32 %v81, 0.0
    %v180 = vmax.f32 %v82, 0.0
    %v181 = vmax.f32 %v83, 0.0
    %v182 = vmax.f32 %v84, 0.0
    %v183 = vmax.f32 %v85, 0.0
    %v184 = vmax.f32 %v86, 0.0
    %v185 = vmax.f32 %v87, 0.0
    %v186 = vmax.f32 %v88, 0.0
    %v187 = vmax.f32 %v89, 0.0
    %v188 = vmax.f32 %v90, 0.0
    %v189 = vmax.f32 %v91, 0.0
    %v190 = vmax.f32 %v92, 0.0
    %v191 = vmax.f32 %v93, 0.0
    %v192 = vmax.f32 %v94, 0.0
    %v193 = vmax.f32 %v95, 0.0
    %v194 = vmax.f32 %v96, 0.0
    %v195 = vmax.f32 %v97, 0.0
    %v196 = vmax.f32 %v98, 0.0
    %v197 = vmax.f32 %v99, 0.0
    %v198 = vmax.f32 %v100, 0.0
    %v199 = vmax.f32 %v101, 0.0
    %v200 = vmax.f32 %v102, 0.0
    %v201 = vmax.f32 %v103, 0.0
    %v202 = vmax.f32 %v104, 0.0
    %v203 = vmax.f32 %v105, 0.0
    %v204 = vmax.f32 %v106, 0.0
    %v205 = vmax.f32 %v107, 0.0
    %v206 = vmax.f32 %v108, 0.0
    %v207 = vmax.f32 %v109, 0.0
    %v208 = vmax.f32 %v110, 0.0
    %v209 = vmax.f32 %v111, 0.0
    %v210 = vmax.f32 %v112, 0.0
    %v211 = vmax.f32 %v113, 0.0
    %v212 = vmax.f32 %v114, 0.0
    %v213 = vmax.f32 %v115, 0.0
    %v214 = vmax.f32 %v116, 0.0
    %v215 = vmax.f32 %v117, 0.0
    %v216 = vmax.f32 %v118, 0.0
    %v217 = vmax.f32 %v119, 0.0
    %v218 = vmax.f32 %v120, 0.0
    %v219 = vmax.f32 %v121, 0.0
    %v220 = vmax.f32 %v122, 0.0
    %221 = vst [vmem:[#allocation5] sm:$0xff] %v123
    %222 = vst [vmem:[#allocation5 + $0x8] sm:$0xff] %v124
    %223 = vst [vmem:[#allocation5 + $0x10] sm:$0xff] %v125
    %224 = vst [vmem:[#allocation5 + $0x18] sm:$0xff] %v126
    %225 = vst [vmem:[#allocation5 + $0x20] sm:$0xff] %v127
    %226 = vst [vmem:[#allocation5 + $0x28] sm:$0xff] %v128
    %227 = vst [vmem:[#allocation5 + $0x30] sm:$0xff] %v129
    %228 = vst [vmem:[#allocation5 + $0x38] sm:$0xff] %v130
    %229 = vst [vmem:[#allocation5 + $0x40] sm:$0xff] %v131
    %230 = vst [vmem:[#allocation5 + $0x48] sm:$0xff] %v132
    %231 = vst [vmem:[#allocation5 + $0x50] sm:$0xff] %v133
    %232 = vst [vmem:[#allocation5 + $0x58] sm:$0xff] %v134
    %233 = vst [vmem:[#allocation5 + $0x60] sm:$0xff] %v135
    %234 = vst [vmem:[#allocation5 + $0x68] sm:$0xff] %v136
    %235 = vst [vmem:[#allocation5 + $0x70] sm:$0xff] %v137
    %236 = vst [vmem:[#allocation5 + $0x78] sm:$0xff] %v138
    %237 = vst [vmem:[#allocation5 + $0x80] sm:$0xff] %v139
    %238 = vst [vmem:[#allocation5 + $0x88] sm:$0xff] %v140
    %239 = vst [vmem:[#allocation5 + $0x90] sm:$0xff] %v141
    %240 = vst [vmem:[#allocation5 + $0x98] sm:$0xff] %v142
    %241 = vst [vmem:[#allocation5 + $0xa0] sm:$0xff] %v143
    %242 = vst [vmem:[#allocation5 + $0xa8] sm:$0xff] %v144
    %243 = vst [vmem:[#allocation5 + $0xb0] sm:$0xff] %v145
    %244 = vst [vmem:[#allocation5 + $0xb8] sm:$0xff] %v146
    %245 = vst [vmem:[#allocation5 + $0xc0] sm:$0xff] %v147
    %246 = vst [vmem:[#allocation5 + $0xc8] sm:$0xff] %v148
    %247 = vst [vmem:[#allocation5 + $0xd0] sm:$0xff] %v149
    %248 = vst [vmem:[#allocation5 + $0xd8] sm:$0xff] %v150
    %249 = vst [vmem:[#allocation5 + $0xe0] sm:$0xff] %v151
    %250 = vst [vmem:[#allocation5 + $0xe8] sm:$0xff] %v152
    %251 = vst [vmem:[#allocation5 + $0xf0] sm:$0xff] %v153
    %252 = vst [vmem:[#allocation5 + $0xf8] sm:$0xff] %v154
    %253 = vst [vmem:[#allocation5 + $0x100] sm:$0xff] %v155
    %254 = vst [vmem:[#allocation5 + $0x108] sm:$0xff] %v156
    %255 = vst [vmem:[#allocation5 + $0x110] sm:$0xff] %v157
    %256 = vst [vmem:[#allocation5 + $0x118] sm:$0xff] %v158
    %257 = vst [vmem:[#allocation5 + $0x120] sm:$0xff] %v159
    %258 = vst [vmem:[#allocation5 + $0x128] sm:$0xff] %v160
    %259 = vst [vmem:[#allocation5 + $0x130] sm:$0xff] %v161
    %260 = vst [vmem:[#allocation5 + $0x138] sm:$0xff] %v162
    %261 = vst [vmem:[#allocation5 + $0x140] sm:$0xff] %v163
    %262 = vst [vmem:[#allocation5 + $0x148] sm:$0xff] %v164
    %263 = vst [vmem:[#allocation5 + $0x150] sm:$0xff] %v165
    %264 = vst [vmem:[#allocation5 + $0x158] sm:$0xff] %v166
    %265 = vst [vmem:[#allocation5 + $0x160] sm:$0xff] %v167
    %266 = vst [vmem:[#allocation5 + $0x168] sm:$0xff] %v168
    %267 = vst [vmem:[#allocation5 + $0x170] sm:$0xff] %v169
    %268 = vst [vmem:[#allocation5 + $0x178] sm:$0xff] %v170
    %269 = vst [vmem:[#allocation5 + $0x180] sm:$0xff] %v171
    %270 = vst [vmem:[#allocation5 + $0x188] sm:$0x3f] %v172
    %271 = vst [vmem:[#allocation5 + $0x190] sm:$0x3f] %v173
    %272 = vst [vmem:[#allocation5 + $0x198] sm:$0x3f] %v174
    %273 = vst [vmem:[#allocation5 + $0x1a0] sm:$0x3f] %v175
    %274 = vst [vmem:[#allocation5 + $0x1a8] sm:$0x3f] %v176
    %275 = vst [vmem:[#allocation5 + $0x1b0] sm:$0x3f] %v177
    %276 = vst [vmem:[#allocation5 + $0x1b8] sm:$0x3f] %v178
    %277 = vst [vmem:[#allocation5 + $0x1c0] sm:$0x3f] %v179
    %278 = vst [vmem:[#allocation5 + $0x1c8] sm:$0x3f] %v180
    %279 = vst [vmem:[#allocation5 + $0x1d0] sm:$0x3f] %v181
    %280 = vst [vmem:[#allocation5 + $0x1d8] sm:$0x3f] %v182
    %281 = vst [vmem:[#allocation5 + $0x1e0] sm:$0x3f] %v183
    %282 = vst [vmem:[#allocation5 + $0x1e8] sm:$0x3f] %v184
    %283 = vst [vmem:[#allocation5 + $0x1f0] sm:$0x3f] %v185
    %284 = vst [vmem:[#allocation5 + $0x1f8] sm:$0x3f] %v186
    %285 = vst [vmem:[#allocation5 + $0x200] sm:$0x3f] %v187
    %286 = vst [vmem:[#allocation5 + $0x208] sm:$0x3f] %v188
    %287 = vst [vmem:[#allocation5 + $0x210] sm:$0x3f] %v189
    %288 = vst [vmem:[#allocation5 + $0x218] sm:$0x3f] %v190
    %289 = vst [vmem:[#allocation5 + $0x220] sm:$0x3f] %v191
    %290 = vst [vmem:[#allocation5 + $0x228] sm:$0x3f] %v192
    %291 = vst [vmem:[#allocation5 + $0x230] sm:$0x3f] %v193
    %292 = vst [vmem:[#allocation5 + $0x238] sm:$0x3f] %v194
    %293 = vst [vmem:[#allocation5 + $0x240] sm:$0x3f] %v195
    %294 = vst [vmem:[#allocation5 + $0x248] sm:$0x3f] %v196
    %295 = vst [vmem:[#allocation5 + $0x250] sm:$0x3f] %v197
    %296 = vst [vmem:[#allocation5 + $0x258] sm:$0x3f] %v198
    %297 = vst [vmem:[#allocation5 + $0x260] sm:$0x3f] %v199
    %298 = vst [vmem:[#allocation5 + $0x268] sm:$0x3f] %v200
    %299 = vst [vmem:[#allocation5 + $0x270] sm:$0x3f] %v201
    %300 = vst [vmem:[#allocation5 + $0x278] sm:$0x3f] %v202
    %301 = vst [vmem:[#allocation5 + $0x280] sm:$0x3f] %v203
    %302 = vst [vmem:[#allocation5 + $0x288] sm:$0x3f] %v204
    %303 = vst [vmem:[#allocation5 + $0x290] sm:$0x3f] %v205
    %304 = vst [vmem:[#allocation5 + $0x298] sm:$0x3f] %v206
    %305 = vst [vmem:[#allocation5 + $0x2a0] sm:$0x3f] %v207
    %306 = vst [vmem:[#allocation5 + $0x2a8] sm:$0x3f] %v208
    %307 = vst [vmem:[#allocation5 + $0x2b0] sm:$0x3f] %v209
    %308 = vst [vmem:[#allocation5 + $0x2b8] sm:$0x3f] %v210
    %309 = vst [vmem:[#allocation5 + $0x2c0] sm:$0x3f] %v211
    %310 = vst [vmem:[#allocation5 + $0x2c8] sm:$0x3f] %v212
    %311 = vst [vmem:[#allocation5 + $0x2d0] sm:$0x3f] %v213
    %312 = vst [vmem:[#allocation5 + $0x2d8] sm:$0x3f] %v214
    %313 = vst [vmem:[#allocation5 + $0x2e0] sm:$0x3f] %v215
    %314 = vst [vmem:[#allocation5 + $0x2e8] sm:$0x3f] %v216
    %315 = vst [vmem:[#allocation5 + $0x2f0] sm:$0x3f] %v217
    %316 = vst [vmem:[#allocation5 + $0x2f8] sm:$0x3f] %v218
    %317 = vst [vmem:[#allocation5 + $0x300] sm:$0x3f] %v219
    %318 = vst [vmem:[#allocation5 + $0x308] sm:$0x3f] %v220
    // Predicated region
    $region10: #{tpu_custom_call.1} parent=1 // pred_check
      _
    $region11: #{tpu_custom_call.1} parent=1 // pred_check_branch
      %320 = sbr.rel (0) target = $region13
    $region12: #{tpu_custom_call.1} parent=1 // pred_region
      %322 = vsyncadd [#allocation4], 0
      %s323 = sshll.u32 [#allocation5], 4
      %s324 = int_to_ptr.vmem [resolvable:$true] %s323
      %s325 = sshll.u32 %s1, 4
      %s326 = int_to_ptr.hbm [resolvable:$true] %s325
      %331 = dma.vmem_to_hbm [thread:$0]  %s324, 12544, %s326, [#allocation4], 6272, 6272, 392
    $region13: #{tpu_custom_call.1} parent=1 // pred_fallthru
      _
    // Predicated region
    $region14: #{tpu_custom_call.1} parent=1 // pred_check
      _
    $region15: #{tpu_custom_call.1} parent=1 // pred_check_branch
      %333 = sbr.rel (0) target = $region17
    $region16: #{tpu_custom_call.1} parent=1 // pred_region
      %335 = dma.done [#allocation4], 12544
    $region17: #{tpu_custom_call.1} parent=1 // pred_fallthru
      _
    %336 = vsyncpa [#allocation3], 1
    %337 = vsyncpa [#allocation4], 1

</llo_original>
